<compile_context>
chip_gen: v5e
topology: v5e:2x2
jax: 0.10.0
libtpu: 0.0.40
codegen_flags: <defaults>
</compile_context>

<pallas_src>
import jax
import jax.numpy as jnp
from jax.experimental import pallas as pl
from jax.experimental.pallas import tpu as pltpu


def _progressive_residual_kernel(scal_ref, x_ref, r_ref, o_ref):
    # scal_ref: SMEM [1] -> sigmoid(alpha) in f32
    a = scal_ref[0]
    x = x_ref[...].astype(jnp.float32)
    r = r_ref[...].astype(jnp.float32)
    o_ref[...] = (x * (1.0 - a) + r * a).astype(o_ref.dtype)


def progressive_residual(x_in, fused_features, alpha, *, lane=128):
    """
    x_in, fused_features: arrays of identical shape (e.g. NCHW [B, C, H, W]).
    alpha: scalar parameter (pre-sigmoid), matches nn.Parameter(torch.tensor(0.1)).
    Returns: array of same shape/dtype as x_in.
    """
    assert x_in.shape == fused_features.shape
    orig_shape = x_in.shape
    out_dtype = x_in.dtype

    # sigmoid(alpha) computed once outside the kernel (cheap scalar glue).
    scalars = jnp.reshape(jax.nn.sigmoid(alpha).astype(jnp.float32), (1,))

    # Flatten row-major (no transpose -> no extra HBM traffic).
    total = 1
    for d in orig_shape:
        total *= d

    itemsize = jnp.dtype(out_dtype).itemsize
    sublane = max(8, 32 // itemsize)          # 8 for f32, 16 for bf16, 32 for int8
    # ~4 MiB per tile buffer -> 8192 rows (f32), 16384 (bf16), 32768 (int8).
    max_tile_rows = max(sublane, (4 * 1024 * 1024) // (lane * itemsize))

    rows = -(-total // lane)                  # cdiv
    lane_pad = rows * lane - total            # only nonzero if total % 128 != 0

    xf = x_in.reshape(total)
    rf = fused_features.reshape(total)
    if lane_pad:
        # Rare: lane remainder only (<128 elems logically, full-array XLA copy).
        xf = jnp.pad(xf, (0, lane_pad))
        rf = jnp.pad(rf, (0, lane_pad))
    x2 = xf.reshape(rows, lane)
    r2 = rf.reshape(rows, lane)

    # >= 2 grid steps whenever possible (v7x has 2 TensorCores), tile rows a
    # multiple of the packed sublane count, capped at ~4 MiB per buffer.
    half_rows = -(-rows // 2)
    tile_rows = -(-half_rows // sublane) * sublane
    tile_rows = max(sublane, min(max_tile_rows, tile_rows))

    grid = (pl.cdiv(rows, tile_rows),)        # ragged tail handled by Pallas masking

    out2 = pl.pallas_call(
        _progressive_residual_kernel,
        out_shape=jax.ShapeDtypeStruct((rows, lane), out_dtype),
        grid_spec=pltpu.PrefetchScalarGridSpec(
            num_scalar_prefetch=0,
            grid=grid,
            in_specs=[
                pl.BlockSpec(memory_space=pltpu.MemorySpace.SMEM),   # sigmoid(alpha)
                pl.BlockSpec((tile_rows, lane), lambda i: (i, 0)),   # x_in tile
                pl.BlockSpec((tile_rows, lane), lambda i: (i, 0)),   # fused tile
            ],
            out_specs=pl.BlockSpec((tile_rows, lane), lambda i: (i, 0)),
        ),
        compiler_params=pltpu.CompilerParams(
            dimension_semantics=("parallel",),
            # 6 buffers x up to 4 MiB = 24 MiB double-buffered; raise scoped
            # VMEM so v5e's 16 MiB default is not the limit (128 MiB physical).
            vmem_limit_bytes=32 << 20,
        ),
    )(scalars, x2, r2)

    out_flat = out2.reshape(rows * lane)
    if lane_pad:
        out_flat = out_flat[:total]
    return out_flat.reshape(orig_shape)


def _reference(x_in, fused_features, alpha):
    a = jax.nn.sigmoid(alpha)
    return x_in * (1.0 - a) + fused_features * a


if __name__ == "__main__":
    key = jax.random.PRNGKey(0)
    B, C, H, W = 2, 4, 16, 16

    k_x, k_r = jax.random.split(key, 2)
    x_in = jax.random.normal(k_x, (B, C, H, W), dtype=jnp.float32)
    fused = jax.random.normal(k_r, (B, C, H, W), dtype=jnp.float32)

    # Matches nn.Parameter(torch.tensor(0.1)) init in the PyTorch module.
    alpha = jnp.float32(0.1)

    out = progressive_residual(x_in, fused, alpha)
    out = jax.block_until_ready(out)

    ref = _reference(x_in, fused, alpha)
    assert out.shape == (B, C, H, W)
    assert out.dtype == x_in.dtype
    assert jnp.allclose(out, ref, atol=1e-6, rtol=1e-6)

    print("KERNEL_OK")
</pallas_src>

<mosaic_0001>
module attributes {stable_mosaic.version = 11 : i64} {
  func.func @_progressive_residual_kernel(%arg0: i32, %arg1: memref<1xf32, #tpu.memory_space<smem>>, %arg2: memref<8x128xf32, #tpu.memory_space<vmem>>, %arg3: memref<8x128xf32, #tpu.memory_space<vmem>>, %arg4: memref<8x128xf32, #tpu.memory_space<vmem>>) attributes {dimension_semantics = [#tpu.dimension_semantics<parallel>], iteration_bounds = array<i64: 2>, scalar_prefetch = 0 : i64, scratch_operands = 0 : i64, tpu.core_type = #tpu.core_type<tc>, window_params = [{transform_indices = @transform_0, window_bounds = array<i64: 1>}, {transform_indices = @transform_1, window_bounds = array<i64: 8, 128>}, {transform_indices = @transform_2, window_bounds = array<i64: 8, 128>}, {transform_indices = @transform_3, window_bounds = array<i64: 8, 128>}]} {
    %c0 = arith.constant 0 : index
    %0 = memref.load %arg1[%c0] : memref<1xf32, #tpu.memory_space<smem>>
    %c0_0 = arith.constant 0 : index
    %c0_1 = arith.constant 0 : index
    %1 = vector.load %arg2[%c0_0, %c0_1] : memref<8x128xf32, #tpu.memory_space<vmem>>, vector<8x128xf32>
    %c0_2 = arith.constant 0 : index
    %c0_3 = arith.constant 0 : index
    %2 = vector.load %arg3[%c0_2, %c0_3] : memref<8x128xf32, #tpu.memory_space<vmem>>, vector<8x128xf32>
    %cst = arith.constant 1.000000e+00 : f32
    %3 = arith.subf %cst, %0 : f32
    %4 = vector.broadcast %3 : f32 to vector<8x128xf32>
    %5 = arith.mulf %1, %4 : vector<8x128xf32>
    %6 = vector.broadcast %0 : f32 to vector<8x128xf32>
    %7 = arith.mulf %2, %6 : vector<8x128xf32>
    %8 = arith.addf %5, %7 : vector<8x128xf32>
    %c0_4 = arith.constant 0 : index
    %c0_5 = arith.constant 0 : index
    %9 = vector.load %arg4[%c0_4, %c0_5] : memref<8x128xf32, #tpu.memory_space<vmem>>, vector<8x128xf32>
    tpu.vector_store %arg4[%c0_4, %c0_5], %8 {strides = array<i32>} : memref<8x128xf32, #tpu.memory_space<vmem>>, vector<8x128xf32>,
    return
  }
  func.func @transform_0(%arg0: i32) -> i32 {
    %c0_i32 = arith.constant 0 : i32
    %c0_i32_0 = arith.constant 0 : i32
    return %c0_i32 : i32
  }
  func.func @transform_1(%arg0: i32) -> (i32, i32) {
    %c0_i32 = arith.constant 0 : i32
    %c0_i32_0 = arith.constant 0 : i32
    return %arg0, %c0_i32 : i32, i32
  }
  func.func @transform_2(%arg0: i32) -> (i32, i32) {
    %c0_i32 = arith.constant 0 : i32
    %c0_i32_0 = arith.constant 0 : i32
    return %arg0, %c0_i32 : i32, i32
  }
  func.func @transform_3(%arg0: i32) -> (i32, i32) {
    %c0_i32 = arith.constant 0 : i32
    %c0_i32_0 = arith.constant 0 : i32
    return %arg0, %c0_i32 : i32, i32
  }
}

</mosaic_0001>

<llo_original>
// kernel: tpu_custom_call.1
$region0: #{tpu_custom_call.1}
  #allocation0 [shape = 'u32[]', space=smem, size = 0x4, offset = 0x4, fixed_abs, tag = 'smem constant byte address 0x4 - core index']
  #allocation1 [shape = 'u32[72,128]{1,0:T(1,128)}', space=vmem, size = 0x9000, scoped, tag = 'internal scratch']
  #allocation2 [shape = 'f32[1]{0:T(128)S(6)}', space=smem, size = 0x200, scoped, tag = 'scoped memory for tpu_custom_call.1']
  %s0 = inlined_call_operand.<no memory space> [shape: f32[1], index: 0, kind: input, shape index: {}]
  %s1 = inlined_call_operand.hbm [shape: f32[16,128], index: 1, kind: input, shape index: {}]
  %s2 = inlined_call_operand.hbm [shape: f32[16,128], index: 2, kind: input, shape index: {}]
  %s3 = inlined_call_operand.hbm [shape: f32[16,128], index: 3, kind: output, shape index: {}]
  %s4 = sld [smem:[#allocation0]]
  $region53: #{tpu_custom_call.1} parent=0
    _
  %s6 = ssub.s32 1, %s4
  %s7 = scalar_select 0, %s6, %s4
  %8 = sst [smem:[#allocation2]] %s0
  $region1: #{tpu_custom_call.1} parent=0
    #allocation3 [shape = 'u8[8192]{0}', space=vmem, size = 0x2000, scoped, tag = 'input window, operand 1']
    #allocation4 [shape = 's32[2]{0}', space=sflag, size = 0x8, scoped, tag = 'scoped memory for tpu_custom_call.1']
    #allocation5 [shape = 's32[2]{0}', space=sflag, size = 0x8, scoped, tag = 'scoped memory for tpu_custom_call.1']
    #allocation6 [shape = 'u8[8192]{0}', space=vmem, size = 0x2000, scoped, tag = 'input window, operand 2']
    #allocation7 [shape = 's32[2]{0}', space=sflag, size = 0x8, scoped, tag = 'scoped memory for tpu_custom_call.1']
    #allocation8 [shape = 'u8[8192]{0}', space=vmem, size = 0x2000, scoped, tag = 'output window, operand 0']
    %9 = vsyncpa [#allocation4], 0
    %s10 = scalar_lea.sflag [#allocation4], 1
    %11 = vsyncpa %s10, 0
    %12 = vsyncpa [#allocation7], 0
    %s13 = scalar_lea.sflag [#allocation7], 1
    %14 = vsyncpa %s13, 0
    %15 = vsyncpa [#allocation5], 0
    %s16 = scalar_lea.sflag [#allocation5], 1
    %17 = vsyncpa %s16, 0
    loop: start=0, step=1, limit=4
    $region2: #{tpu_custom_call.1} parent=1 // loop_pre_header
      _
    $region3: #{tpu_custom_call.1} parent=1 // loop_header
      %s19 = sphi 0, %s23
      %p20 = scmp.ge.s32.totalorder %s19, 4
      %s27 = sphi 0, %s27
      %s29 = sphi 0, %s27
      %s30 = sphi 0, %s29
      %s44 = sphi 0, %s30
      %s50 = sphi 0, %s52
      %s53 = sphi 0, %s50
      %s54 = sphi 0, %s53
      %s70 = sphi 0, %s54
      %s76 = sphi 0, %s78
      %s79 = sphi 0, %s76
      %s80 = sphi 0, %s79
      %s96 = sphi 0, %s80
      %s102 = sphi 0, %s104
      %s105 = sphi 0, %s102
      %s106 = sphi 0, %s105
      %s122 = sphi 0, %s106
    $region4: #{tpu_custom_call.1} parent=1 // loop_header_branch
      %22 = sbr.rel (%p20) target = $region8
    $region5: #{tpu_custom_call.1} parent=1 // loop_body
      %s24 = ssub.s32 %s19, 1
      %s25 = ssub.s32 %s19, 2
      %s26 = sadd.s32 %s19, 1
      %s28 = sadd.s32 %s27, 1
      %p31 = scmp.eq.s32.totalorder %s19, 1
      %p32 = scmp.ne.s32.totalorder %s27, %s29
      %p33 = scmp.eq.s32.totalorder %s19, 0
      %p34 = por %p32, %p33
      %p35 = scmp.ne.s32.totalorder %s27, %s29
      %p36 = scmp.eq.s32.totalorder %s24, 1
      %p37 = por %p35, %p36
      %p38 = scmp.ne.s32.totalorder %s29, %s30
      %p39 = scmp.eq.s32.totalorder %s24, 0
      %p40 = por %p38, %p39
      %p41 = scmp.ne.s32.totalorder %s29, %s30
      %p42 = scmp.eq.s32.totalorder %s25, 1
      %p43 = por %p41, %p42
      %p45 = scmp.ne.s32.totalorder %s30, %s44
      %p46 = scmp.eq.s32.totalorder %s25, 0
      %p47 = por %p45, %p46
      %s48 = ssub.s32 %s19, %s26
      %p49 = scmp.eq.s32.totalorder %s48, 0
      %s51 = sadd.s32 %s50, 1
      %s52 = scalar_select %p49, %s50, %s51
      %p55 = pneg %p49
      %p56 = scmp.eq.s32.totalorder %s19, 1
      %p57 = por %p55, %p56
      %p58 = scmp.ne.s32.totalorder %s50, %s53
      %p59 = scmp.eq.s32.totalorder %s19, 0
      %p60 = por %p58, %p59
      %p61 = scmp.ne.s32.totalorder %s50, %s53
      %p62 = scmp.eq.s32.totalorder %s24, 1
      %p63 = por %p61, %p62
      %p64 = scmp.ne.s32.totalorder %s53, %s54
      %p65 = scmp.eq.s32.totalorder %s24, 0
      %p66 = por %p64, %p65
      %p67 = scmp.ne.s32.totalorder %s53, %s54
      %p68 = scmp.eq.s32.totalorder %s25, 1
      %p69 = por %p67, %p68
      %p71 = scmp.ne.s32.totalorder %s54, %s70
      %p72 = scmp.eq.s32.totalorder %s25, 0
      %p73 = por %p71, %p72
      %s74 = ssub.s32 %s19, %s26
      %p75 = scmp.eq.s32.totalorder %s74, 0
      %s77 = sadd.s32 %s76, 1
      %s78 = scalar_select %p75, %s76, %s77
      %p81 = pneg %p75
      %p82 = scmp.eq.s32.totalorder %s19, 1
      %p83 = por %p81, %p82
      %p84 = scmp.ne.s32.totalorder %s76, %s79
      %p85 = scmp.eq.s32.totalorder %s19, 0
      %p86 = por %p84, %p85
      %p87 = scmp.ne.s32.totalorder %s76, %s79
      %p88 = scmp.eq.s32.totalorder %s24, 1
      %p89 = por %p87, %p88
      %p90 = scmp.ne.s32.totalorder %s79, %s80
      %p91 = scmp.eq.s32.totalorder %s24, 0
      %p92 = por %p90, %p91
      %p93 = scmp.ne.s32.totalorder %s79, %s80
      %p94 = scmp.eq.s32.totalorder %s25, 1
      %p95 = por %p93, %p94
      %p97 = scmp.ne.s32.totalorder %s80, %s96
      %p98 = scmp.eq.s32.totalorder %s25, 0
      %p99 = por %p97, %p98
      %s100 = ssub.s32 %s19, %s26
      %p101 = scmp.eq.s32.totalorder %s100, 0
      %s103 = sadd.s32 %s102, 1
      %s104 = scalar_select %p101, %s102, %s103
      %p107 = pneg %p101
      %p108 = scmp.eq.s32.totalorder %s19, 1
      %p109 = por %p107, %p108
      %p110 = scmp.ne.s32.totalorder %s102, %s105
      %p111 = scmp.eq.s32.totalorder %s19, 0
      %p112 = por %p110, %p111
      %p113 = scmp.ne.s32.totalorder %s102, %s105
      %p114 = scmp.eq.s32.totalorder %s24, 1
      %p115 = por %p113, %p114
      %p116 = scmp.ne.s32.totalorder %s105, %s106
      %p117 = scmp.eq.s32.totalorder %s24, 0
      %p118 = por %p116, %p117
      %p119 = scmp.ne.s32.totalorder %s105, %s106
      %p120 = scmp.eq.s32.totalorder %s25, 1
      %p121 = por %p119, %p120
      %p123 = scmp.ne.s32.totalorder %s106, %s122
      %p124 = scmp.eq.s32.totalorder %s25, 0
      %p125 = por %p123, %p124
      %p126 = scmp.le.s32.totalorder 1, %s19
      %p127 = scmp.lt.s32.totalorder %s19, 3
      %p128 = pnand %p126, %p127
      %p129 = pneg %p128
      // Predicated region
      $region9: #{tpu_custom_call.1} parent=5 // pred_check
        _
      $region10: #{tpu_custom_call.1} parent=5 // pred_check_branch
        %131 = sbr.rel (%p128) target = $region12
      $region11: #{tpu_custom_call.1} parent=5 // pred_region
        %s132 = ssub.s32 %s19, 1
        // Predicated region
        $region13: #{tpu_custom_call.1} parent=11 // pred_check
          %p133 = pneg %p40
        $region14: #{tpu_custom_call.1} parent=11 // pred_check_branch
          %135 = sbr.rel (%p133) target = $region16
        $region15: #{tpu_custom_call.1} parent=11 // pred_region
          _
        $region16: #{tpu_custom_call.1} parent=11 // pred_fallthru
          _
      $region12: #{tpu_custom_call.1} parent=5 // pred_fallthru
        _
      %p136 = scmp.lt.s32.totalorder %s19, 2
      // Predicated region
      $region17: #{tpu_custom_call.1} parent=5 // pred_check
        %p137 = pneg %p136
      $region18: #{tpu_custom_call.1} parent=5 // pred_check_branch
        %139 = sbr.rel (%p137) target = $region20
      $region19: #{tpu_custom_call.1} parent=5 // pred_region
        // Predicated region
        $region21: #{tpu_custom_call.1} parent=19 // pred_check
          %p140 = pneg %p60
        $region22: #{tpu_custom_call.1} parent=19 // pred_check_branch
          %142 = sbr.rel (%p140) target = $region24
        $region23: #{tpu_custom_call.1} parent=19 // pred_region
          %s143 = sand.u32 %s50, 1
          %s144 = scalar_lea.sflag [#allocation4], %s143
          %s145 = sand.u32 %s50, 1
          %s146 = smul.addr %s145, 8
          %s147 = scalar_lea.vmem [#allocation3], %s146
          %149 = vsyncadd %s144, 0
          %s150 = smul.addr %s19, 8
          %s151 = scalar_lea.hbm %s1, %s150
          %s153 = sshll.u32 %s151, 4
          %s154 = int_to_ptr.hbm [resolvable:$true] %s153
          %s155 = sshll.u32 %s147, 4
          %s156 = int_to_ptr.vmem [resolvable:$true] %s155
          %158 = dma.hbm_to_vmem [thread:$0]  %s154, 128, %s156, %s144
        $region24: #{tpu_custom_call.1} parent=19 // pred_fallthru
          _
        // Predicated region
        $region25: #{tpu_custom_call.1} parent=19 // pred_check
          %p159 = pneg %p86
        $region26: #{tpu_custom_call.1} parent=19 // pred_check_branch
          %161 = sbr.rel (%p159) target = $region28
        $region27: #{tpu_custom_call.1} parent=19 // pred_region
          %s162 = sand.u32 %s76, 1
          %s163 = scalar_lea.sflag [#allocation7], %s162
          %s164 = sand.u32 %s76, 1
          %s165 = smul.addr %s164, 8
          %s166 = scalar_lea.vmem [#allocation6], %s165
          %168 = vsyncadd %s163, 0
          %s169 = smul.addr %s19, 8
          %s170 = scalar_lea.hbm %s2, %s169
          %s172 = sshll.u32 %s170, 4
          %s173 = int_to_ptr.hbm [resolvable:$true] %s172
          %s174 = sshll.u32 %s166, 4
          %s175 = int_to_ptr.vmem [resolvable:$true] %s174
          %177 = dma.hbm_to_vmem [thread:$0]  %s173, 128, %s175, %s163
        $region28: #{tpu_custom_call.1} parent=19 // pred_fallthru
          _
      $region20: #{tpu_custom_call.1} parent=5 // pred_fallthru
        _
      %p178 = scmp.le.s32.totalorder 1, %s19
      %p179 = scmp.lt.s32.totalorder %s19, 3
      %p180 = pnand %p178, %p179
      %p181 = pneg %p180
      // Predicated region
      $region29: #{tpu_custom_call.1} parent=5 // pred_check
        _
      $region30: #{tpu_custom_call.1} parent=5 // pred_check_branch
        %183 = sbr.rel (%p180) target = $region32
      $region31: #{tpu_custom_call.1} parent=5 // pred_region
        %s184 = ssub.s32 %s19, 1
        %s185 = sand.u32 %s53, 1
        %s186 = scalar_lea.sflag [#allocation4], %s185
        %s187 = sand.u32 %s53, 1
        %s188 = smul.addr %s187, 8
        %s189 = scalar_lea.vmem [#allocation3], %s188
        // Predicated region
        $region33: #{tpu_custom_call.1} parent=31 // pred_check
          %p190 = pneg %p66
        $region34: #{tpu_custom_call.1} parent=31 // pred_check_branch
          %192 = sbr.rel (%p190) target = $region36
        $region35: #{tpu_custom_call.1} parent=31 // pred_region
          %194 = dma.done %s186, 128
        $region36: #{tpu_custom_call.1} parent=31 // pred_fallthru
          _
        %s195 = sand.u32 %s79, 1
        %s196 = scalar_lea.sflag [#allocation7], %s195
        %s197 = sand.u32 %s79, 1
        %s198 = smul.addr %s197, 8
        %s199 = scalar_lea.vmem [#allocation6], %s198
        // Predicated region
        $region37: #{tpu_custom_call.1} parent=31 // pred_check
          %p200 = pneg %p92
        $region38: #{tpu_custom_call.1} parent=31 // pred_check_branch
          %202 = sbr.rel (%p200) target = $region40
        $region39: #{tpu_custom_call.1} parent=31 // pred_region
          %204 = dma.done %s196, 128
        $region40: #{tpu_custom_call.1} parent=31 // pred_fallthru
          _
        %p205 = pneg %p40
        %p206 = pneg %p37
        %s207 = sand.u32 %s53, 1
        %s208 = scalar_lea.sflag [#allocation4], %s207
        %s209 = sand.u32 %s53, 1
        %s210 = smul.addr %s209, 8
        %s211 = scalar_lea.vmem [#allocation3], %s210
        %p212 = pneg %p66
        %p213 = pneg %p63
        %s214 = sand.u32 %s79, 1
        %s215 = scalar_lea.sflag [#allocation7], %s214
        %s216 = sand.u32 %s79, 1
        %s217 = smul.addr %s216, 8
        %s218 = scalar_lea.vmem [#allocation6], %s217
        %p219 = pneg %p92
        %p220 = pneg %p89
        %p221 = pneg %p118
        %p222 = pneg %p115
        %s223 = sand.u32 %s105, 1
        %s224 = scalar_lea.sflag [#allocation5], %s223
        %s225 = sand.u32 %s105, 1
        %s226 = smul.addr %s225, 8
        %s227 = scalar_lea.vmem [#allocation8], %s226
        %s228 = sld [smem:[#allocation2]]
        %v229 = vld [vmem:[%s189] sm:$0xff]
        %v230 = vld [vmem:[%s199] sm:$0xff]
        %s231 = ssub.f32 1.0, %s228
        %v232 = vstv %s231
        %v233 = vmul.f32 %v229, %v232
        %v234 = vstv %s228
        %v235 = vmul.f32 %v230, %v234
        %v236 = vadd.f32 %v233, %v235
        %237 = vst [vmem:[%s227] sm:$0xff] %v236
        %s238 = sand.u32 %s105, 1
        %s239 = scalar_lea.sflag [#allocation5], %s238
        %s240 = sand.u32 %s105, 1
        %s241 = smul.addr %s240, 8
        %s242 = scalar_lea.vmem [#allocation8], %s241
        // Predicated region
        $region41: #{tpu_custom_call.1} parent=31 // pred_check
          %p243 = pneg %p115
        $region42: #{tpu_custom_call.1} parent=31 // pred_check_branch
          %245 = sbr.rel (%p243) target = $region44
        $region43: #{tpu_custom_call.1} parent=31 // pred_region
          %247 = vsyncadd %s239, 0
          %s248 = smul.addr %s24, 8
          %s249 = scalar_lea.hbm %s3, %s248
          %s251 = sshll.u32 %s242, 4
          %s252 = int_to_ptr.vmem [resolvable:$true] %s251
          %s253 = sshll.u32 %s249, 4
          %s254 = int_to_ptr.hbm [resolvable:$true] %s253
          %256 = dma.vmem_to_hbm [thread:$0]  %s252, 128, %s254, %s239
        $region44: #{tpu_custom_call.1} parent=31 // pred_fallthru
          _
      $region32: #{tpu_custom_call.1} parent=5 // pred_fallthru
        _
      %p257 = scmp.le.s32.totalorder 2, %s19
      // Predicated region
      $region45: #{tpu_custom_call.1} parent=5 // pred_check
        %p258 = pneg %p257
      $region46: #{tpu_custom_call.1} parent=5 // pred_check_branch
        %260 = sbr.rel (%p258) target = $region48
      $region47: #{tpu_custom_call.1} parent=5 // pred_region
        %s261 = ssub.s32 %s19, 2
        // Predicated region
        $region49: #{tpu_custom_call.1} parent=47 // pred_check
          %p262 = pneg %p121
        $region50: #{tpu_custom_call.1} parent=47 // pred_check_branch
          %264 = sbr.rel (%p262) target = $region52
        $region51: #{tpu_custom_call.1} parent=47 // pred_region
          %s265 = sand.u32 %s106, 1
          %s266 = scalar_lea.sflag [#allocation5], %s265
          %s267 = sand.u32 %s106, 1
          %s268 = smul.addr %s267, 8
          %s269 = scalar_lea.vmem [#allocation8], %s268
          %271 = dma.done %s266, 128
        $region52: #{tpu_custom_call.1} parent=47 // pred_fallthru
          _
      $region48: #{tpu_custom_call.1} parent=5 // pred_fallthru
        _
    $region6: #{tpu_custom_call.1} parent=1 // loop_footer
      %s23 = sadd.s32 1, %s19
    $region7: #{tpu_custom_call.1} parent=1 // loop_footer_branch
      %18 = sbr.rel target = $region3
    $region8: #{tpu_custom_call.1} parent=1 // loop_exit
      _
    %272 = vsyncpa [#allocation4], 1
    %s273 = scalar_lea.sflag [#allocation4], 1
    %274 = vsyncpa %s273, 1
    %275 = vsyncpa [#allocation7], 1
    %s276 = scalar_lea.sflag [#allocation7], 1
    %277 = vsyncpa %s276, 1
    %278 = vsyncpa [#allocation5], 1
    %s279 = scalar_lea.sflag [#allocation5], 1
    %280 = vsyncpa %s279, 1

</llo_original>
